<compile_context>
chip_gen: v7x
topology: tpu7x:2x2x1
jax: 0.10.0
libtpu: 0.0.40
codegen_flags: <defaults>
</compile_context>

<pallas_src>
import functools

import jax
import jax.numpy as jnp
from jax.experimental import pallas as pl
from jax.experimental.pallas import tpu as pltpu

_MIB = 1024 * 1024


def _scoped_vmem_limit_bytes():
    """Generation-aware scoped-VMEM limit (headroom below physical VMEM)."""
    try:
        cap = int(getattr(pltpu.get_tpu_info(), "vmem_capacity_bytes", 0))
    except Exception:
        cap = 0
    if cap <= 0:
        cap = 64 * _MIB  # conservative default: v7x physical per-TensorCore
    # 3/4 of physical: v5e/v6e (128 MiB) -> 96 MiB, v7x (64 MiB) -> 48 MiB.
    return int(min(cap * 3 // 4, 96 * _MIB))


def _choose_channel_tile(C, tc_max):
    """Largest legal channel tile fitting VMEM, preferring >= 2 grid steps.

    Legality: the sublane dim of the block must be a multiple of 8 or equal
    the full channel extent. Returns None if no legal tile fits the budget
    (caller then takes the HW-tiled fallback path).
    """
    if C <= 8:
        return C if tc_max >= C else None
    if tc_max < 8:
        return None
    # Prefer ~2 tiles so both v7x TensorCores get work and the pipeline
    # overlaps input DMA of tile i+1 with compute of i and writeback of i-1.
    half = (C + 1) // 2
    tc = ((half + 7) // 8) * 8          # 8-aligned tile covering ~C/2
    tc = min(tc, (tc_max // 8) * 8)     # shrink to the VMEM budget
    return tc


# --------------------------------------------------------------------------
# Main (fused) path: whole (N, tc, HW) channel tile resident in VMEM.
# --------------------------------------------------------------------------
def _bn_fused_kernel(x_ref, gamma_ref, beta_ref, o_ref, *, eps, inv_count):
    # x_ref / o_ref: (N, tc, HW) block.  gamma_ref / beta_ref: (tc, 1) f32.
    x = x_ref[...].astype(jnp.float32)

    # Pass 1: per-channel mean. Reduce batch axis first (VPU slab adds), then
    # the lane axis (XLU reduce).
    s1 = jnp.sum(jnp.sum(x, axis=0), axis=-1, keepdims=True)          # (tc, 1)
    mean = s1 * inv_count

    # Pass 2: centered biased variance (numerically robust; tile is resident,
    # so the extra pass costs no HBM traffic).
    xc = x - mean[None, :, :]
    ssq = jnp.sum(jnp.sum(xc * xc, axis=0), axis=-1, keepdims=True)   # (tc, 1)
    inv = jax.lax.rsqrt(ssq * inv_count + eps)

    # Fuse the affine into the normalization: one FMA per element.
    scale = gamma_ref[...] * inv                                      # (tc, 1)
    shift = beta_ref[...] - mean * scale                              # (tc, 1)
    o_ref[...] = (x * scale[None, :, :] + shift[None, :, :]).astype(o_ref.dtype)


# --------------------------------------------------------------------------
# Fallback path for large N*H*W: HW-tiled stats pass + apply pass.
# --------------------------------------------------------------------------
def _bn_stats_kernel(x_ref, s1_ref, s2_ref, *, hw_total, thw):
    j = pl.program_id(1)

    @pl.when(j == 0)
    def _():
        s1_ref[...] = jnp.zeros_like(s1_ref)
        s2_ref[...] = jnp.zeros_like(s2_ref)

    x = x_ref[...].astype(jnp.float32)                                # (N, tc, thw)
    # Mask lanes past the true HW extent in the (possibly padded) last tile.
    lane = jax.lax.broadcasted_iota(jnp.int32, x.shape, dimension=2)
    x = jnp.where(j * thw + lane < hw_total, x, 0.0)
    s1_ref[...] += jnp.sum(jnp.sum(x, axis=0), axis=-1, keepdims=True)
    s2_ref[...] += jnp.sum(jnp.sum(x * x, axis=0), axis=-1, keepdims=True)


def _bn_apply_kernel(x_ref, scale_ref, shift_ref, o_ref):
    x = x_ref[...].astype(jnp.float32)
    o_ref[...] = (x * scale_ref[...][None, :, :]
                  + shift_ref[...][None, :, :]).astype(o_ref.dtype)


# --------------------------------------------------------------------------
# Wrapper
# --------------------------------------------------------------------------
def slim_batchnorm2d(x, gamma, beta, *, eps=1e-5):
    """Training-mode BatchNorm2d forward (the branch SlimBatchNorm2d selects).

    x:     (N, C, H, W)  — PyTorch NCHW layout
    gamma: (C,)          — affine weight of the selected BatchNorm2d
    beta:  (C,)          — affine bias of the selected BatchNorm2d
    """
    N, C, H, W = x.shape
    HW = H * W

    # Free views only — no HBM transpose round-trips.
    x3 = x.reshape(N, C, HW)
    gamma2 = gamma.reshape(C, 1).astype(jnp.float32)
    beta2 = beta.reshape(C, 1).astype(jnp.float32)

    vmem_limit = _scoped_vmem_limit_bytes()
    in_item = jnp.dtype(x.dtype).itemsize
    out_item = in_item
    # Double-buffered in+out blocks plus the in-kernel f32 working set
    # (an extra f32 copy when the input dtype is narrower than f32).
    work = 4 if jnp.dtype(x.dtype) == jnp.dtype(jnp.float32) else 8
    per_elem = 2 * (in_item + out_item) + work
    usable = max(vmem_limit - 2 * _MIB, per_elem)   # headroom for params/misc
    max_block_elems = usable // per_elem
    inv_count = 1.0 / float(N * HW)

    tc_max = max_block_elems // (N * HW)
    tc = _choose_channel_tile(C, tc_max)

    if tc is not None:
        # ---- Fused single-pass-over-HBM path ----
        grid = (pl.cdiv(C, tc),)
        out3 = pl.pallas_call(
            functools.partial(_bn_fused_kernel, eps=eps, inv_count=inv_count),
            out_shape=jax.ShapeDtypeStruct((N, C, HW), x.dtype),
            grid=grid,
            in_specs=[
                pl.BlockSpec((N, tc, HW), lambda i: (0, i, 0)),
                pl.BlockSpec((tc, 1), lambda i: (i, 0)),
                pl.BlockSpec((tc, 1), lambda i: (i, 0)),
            ],
            out_specs=pl.BlockSpec((N, tc, HW), lambda i: (0, i, 0)),
            compiler_params=pltpu.CompilerParams(
                dimension_semantics=("parallel",),
                vmem_limit_bytes=vmem_limit),
        )(x3, gamma2, beta2)
        return out3.reshape(N, C, H, W)

    # ---- Fallback: feature map too large for a whole-HW channel tile. ----
    # Two streaming passes (stats + apply), HW tiled in lane-aligned chunks.
    # One-pass E[x^2]-mean^2 with f32 accumulation is used here because x is
    # not VMEM-resident across passes (a centered pass would re-read HBM).
    tc = C if C <= 8 else 8
    thw_max = max(max_block_elems // (N * tc), 1)
    thw = max(128, (thw_max // 128) * 128)
    if thw >= HW:
        thw = HW
    c_tiles = pl.cdiv(C, tc)
    hw_tiles = pl.cdiv(HW, thw)

    s1, s2 = pl.pallas_call(
        functools.partial(_bn_stats_kernel, hw_total=HW, thw=thw),
        out_shape=(jax.ShapeDtypeStruct((C, 1), jnp.float32),
                   jax.ShapeDtypeStruct((C, 1), jnp.float32)),
        grid=(c_tiles, hw_tiles),
        in_specs=[pl.BlockSpec((N, tc, thw), lambda i, j: (0, i, j))],
        out_specs=(pl.BlockSpec((tc, 1), lambda i, j: (i, 0)),
                   pl.BlockSpec((tc, 1), lambda i, j: (i, 0))),
        compiler_params=pltpu.CompilerParams(
            dimension_semantics=("parallel", "arbitrary"),
            vmem_limit_bytes=vmem_limit),
    )(x3)

    # Tiny per-channel math in plain JAX (C elements).
    mean = s1 * inv_count
    var = jnp.maximum(s2 * inv_count - mean * mean, 0.0)
    inv = jax.lax.rsqrt(var + eps)
    scale = gamma2 * inv
    shift = beta2 - mean * scale

    out3 = pl.pallas_call(
        _bn_apply_kernel,
        out_shape=jax.ShapeDtypeStruct((N, C, HW), x.dtype),
        grid=(c_tiles, hw_tiles),
        in_specs=[
            pl.BlockSpec((N, tc, thw), lambda i, j: (0, i, j)),
            pl.BlockSpec((tc, 1), lambda i, j: (i, 0)),
            pl.BlockSpec((tc, 1), lambda i, j: (i, 0)),
        ],
        out_specs=pl.BlockSpec((N, tc, thw), lambda i, j: (0, i, j)),
        compiler_params=pltpu.CompilerParams(
            dimension_semantics=("parallel", "parallel"),
            vmem_limit_bytes=vmem_limit),
    )(x3, scale, shift)
    return out3.reshape(N, C, H, W)


def _reference(x, gamma, beta, eps=1e-5):
    xf = x.astype(jnp.float32)
    mean = jnp.mean(xf, axis=(0, 2, 3), keepdims=True)
    var = jnp.mean((xf - mean) ** 2, axis=(0, 2, 3), keepdims=True)
    y = (xf - mean) * jax.lax.rsqrt(var + eps)
    y = y * gamma.reshape(1, -1, 1, 1) + beta.reshape(1, -1, 1, 1)
    return y.astype(x.dtype)


if __name__ == "__main__":
    key = jax.random.PRNGKey(0)

    # SlimBatchNorm2d(max_channels=4, rhos=[0.25, 0.5, 1.0]) with self.rho = 1
    # selects the BatchNorm2d(max_channels) branch -> C = 4 channels.
    max_channels = 4
    N, C, H, W = 2, max_channels, 16, 16
    kx, kg, kb, key = jax.random.split(key, 4)
    x = jax.random.normal(kx, (N, C, H, W), dtype=jnp.float32)
    gamma = 1.0 + 0.1 * jax.random.normal(kg, (C,), dtype=jnp.float32)
    beta = 0.1 * jax.random.normal(kb, (C,), dtype=jnp.float32)

    y = slim_batchnorm2d(x, gamma, beta)
    jax.block_until_ready(y)
    y_ref = _reference(x, gamma, beta)
    assert y.shape == (N, C, H, W)
    assert jnp.allclose(y, y_ref, atol=1e-4, rtol=1e-4), "mismatch vs reference"

    # Second check: C not a multiple of the channel tile (exercises the >=2
    # grid steps path with a padded last channel block).
    N2, C2, H2, W2 = 2, 12, 8, 16
    kx2, kg2, kb2, key = jax.random.split(key, 4)
    x2 = jax.random.normal(kx2, (N2, C2, H2, W2), dtype=jnp.float32)
    gamma_2 = 1.0 + 0.1 * jax.random.normal(kg2, (C2,), dtype=jnp.float32)
    beta_2 = 0.1 * jax.random.normal(kb2, (C2,), dtype=jnp.float32)

    y2 = slim_batchnorm2d(x2, gamma_2, beta_2)
    jax.block_until_ready(y2)
    y2_ref = _reference(x2, gamma_2, beta_2)
    assert y2.shape == (N2, C2, H2, W2)
    assert jnp.allclose(y2, y2_ref, atol=1e-4, rtol=1e-4), "mismatch (C=12)"

    print("KERNEL_OK")
</pallas_src>

<mosaic_0001>
module attributes {stable_mosaic.version = 11 : i64} {
  func.func @_bn_fused_kernel(%arg0: i32, %arg1: memref<2x4x256xf32, #tpu.memory_space<vmem>>, %arg2: memref<4x1xf32, #tpu.memory_space<vmem>>, %arg3: memref<4x1xf32, #tpu.memory_space<vmem>>, %arg4: memref<2x4x256xf32, #tpu.memory_space<vmem>>) attributes {dimension_semantics = [#tpu.dimension_semantics<parallel>], iteration_bounds = array<i64: 1>, scalar_prefetch = 0 : i64, scratch_operands = 0 : i64, tpu.core_type = #tpu.core_type<tc>, window_params = [{transform_indices = @transform_0, window_bounds = array<i64: 2, 4, 256>}, {transform_indices = @transform_1, window_bounds = array<i64: 4, 1>}, {transform_indices = @transform_2, window_bounds = array<i64: 4, 1>}, {transform_indices = @transform_3, window_bounds = array<i64: 2, 4, 256>}]} {
    %c0 = arith.constant 0 : index
    %c0_0 = arith.constant 0 : index
    %c0_1 = arith.constant 0 : index
    %0 = vector.load %arg1[%c0, %c0_0, %c0_1] : memref<2x4x256xf32, #tpu.memory_space<vmem>>, vector<2x4x256xf32>
    %cst = arith.constant dense<0.000000e+00> : vector<4x256xf32>
    %1 = vector.multi_reduction <add>, %0, %cst [0] : vector<2x4x256xf32> to vector<4x256xf32>
    %cst_2 = arith.constant dense<0.000000e+00> : vector<4xf32>
    %2 = vector.multi_reduction <add>, %1, %cst_2 [1] : vector<4x256xf32> to vector<4xf32>
    %3 = vector.shape_cast %2 : vector<4xf32> to vector<4x1xf32>
    %cst_3 = arith.constant 0.001953125 : f32
    %4 = vector.broadcast %cst_3 : f32 to vector<4x1xf32>
    %5 = arith.mulf %3, %4 : vector<4x1xf32>
    %6 = vector.shape_cast %5 : vector<4x1xf32> to vector<1x4x1xf32>
    %7 = vector.broadcast %6 : vector<1x4x1xf32> to vector<2x4x256xf32>
    %8 = arith.subf %0, %7 : vector<2x4x256xf32>
    %9 = arith.mulf %8, %8 : vector<2x4x256xf32>
    %cst_4 = arith.constant dense<0.000000e+00> : vector<4x256xf32>
    %10 = vector.multi_reduction <add>, %9, %cst_4 [0] : vector<2x4x256xf32> to vector<4x256xf32>
    %cst_5 = arith.constant dense<0.000000e+00> : vector<4xf32>
    %11 = vector.multi_reduction <add>, %10, %cst_5 [1] : vector<4x256xf32> to vector<4xf32>
    %12 = vector.shape_cast %11 : vector<4xf32> to vector<4x1xf32>
    %cst_6 = arith.constant 0.001953125 : f32
    %13 = vector.broadcast %cst_6 : f32 to vector<4x1xf32>
    %14 = arith.mulf %12, %13 : vector<4x1xf32>
    %cst_7 = arith.constant 9.99999974E-6 : f32
    %15 = vector.broadcast %cst_7 : f32 to vector<4x1xf32>
    %16 = arith.addf %14, %15 : vector<4x1xf32>
    %17 = math.rsqrt %16 : vector<4x1xf32>
    %c0_8 = arith.constant 0 : index
    %c0_9 = arith.constant 0 : index
    %18 = vector.load %arg2[%c0_8, %c0_9] : memref<4x1xf32, #tpu.memory_space<vmem>>, vector<4x1xf32>
    %19 = arith.mulf %18, %17 : vector<4x1xf32>
    %c0_10 = arith.constant 0 : index
    %c0_11 = arith.constant 0 : index
    %20 = vector.load %arg3[%c0_10, %c0_11] : memref<4x1xf32, #tpu.memory_space<vmem>>, vector<4x1xf32>
    %21 = arith.mulf %5, %19 : vector<4x1xf32>
    %22 = arith.subf %20, %21 : vector<4x1xf32>
    %23 = vector.shape_cast %19 : vector<4x1xf32> to vector<1x4x1xf32>
    %24 = vector.broadcast %23 : vector<1x4x1xf32> to vector<2x4x256xf32>
    %25 = arith.mulf %0, %24 : vector<2x4x256xf32>
    %26 = vector.shape_cast %22 : vector<4x1xf32> to vector<1x4x1xf32>
    %27 = vector.broadcast %26 : vector<1x4x1xf32> to vector<2x4x256xf32>
    %28 = arith.addf %25, %27 : vector<2x4x256xf32>
    %c0_12 = arith.constant 0 : index
    %c0_13 = arith.constant 0 : index
    %c0_14 = arith.constant 0 : index
    %29 = vector.load %arg4[%c0_12, %c0_13, %c0_14] : memref<2x4x256xf32, #tpu.memory_space<vmem>>, vector<2x4x256xf32>
    tpu.vector_store %arg4[%c0_12, %c0_13, %c0_14], %28 {strides = array<i32>} : memref<2x4x256xf32, #tpu.memory_space<vmem>>, vector<2x4x256xf32>,
    return
  }
  func.func @transform_0(%arg0: i32) -> (i32, i32, i32) {
    %c0_i32 = arith.constant 0 : i32
    %c0_i32_0 = arith.constant 0 : i32
    %c0_i32_1 = arith.constant 0 : i32
    return %c0_i32, %arg0, %c0_i32_0 : i32, i32, i32
  }
  func.func @transform_1(%arg0: i32) -> (i32, i32) {
    %c0_i32 = arith.constant 0 : i32
    %c0_i32_0 = arith.constant 0 : i32
    return %arg0, %c0_i32 : i32, i32
  }
  func.func @transform_2(%arg0: i32) -> (i32, i32) {
    %c0_i32 = arith.constant 0 : i32
    %c0_i32_0 = arith.constant 0 : i32
    return %arg0, %c0_i32 : i32, i32
  }
  func.func @transform_3(%arg0: i32) -> (i32, i32, i32) {
    %c0_i32 = arith.constant 0 : i32
    %c0_i32_0 = arith.constant 0 : i32
    %c0_i32_1 = arith.constant 0 : i32
    return %c0_i32, %arg0, %c0_i32_0 : i32, i32, i32
  }
}

</mosaic_0001>

<llo_original>
// kernel: tpu_custom_call.1
$region0: #{tpu_custom_call.1}
  #allocation0 [shape = 'u32[]', space=smem, size = 0x4, offset = 0x4, fixed_abs, tag = 'smem constant byte address 0x4 - core index']
  #allocation1 [shape = 'u32[144,128]{1,0:T(1,128)}', space=vmem, size = 0x12000, scoped, tag = 'internal scratch']
  %s0 = inlined_call_operand.hbm [shape: f32[2,4,256], index: 0, kind: input, shape index: {}]
  %s1 = inlined_call_operand.vmem [shape: f32[4,1], index: 1, kind: input, shape index: {}]
  %s2 = inlined_call_operand.vmem [shape: f32[4,1], index: 2, kind: input, shape index: {}]
  %s3 = inlined_call_operand.hbm [shape: f32[2,4,256], index: 3, kind: output, shape index: {}]
  %s4 = sld [smem:[#allocation0]]
  $region26: #{tpu_custom_call.1} parent=0
    _
  %s6 = ssub.s32 1, %s4
  %s7 = scalar_select 0, %s6, %s4
  $region1: #{tpu_custom_call.1} parent=0
    #allocation2 [shape = 'u8[8192]{0}', space=vmem, size = 0x2000, scoped, tag = 'input window, operand 0, single buffered']
    #allocation3 [shape = 's32[1]{0}', space=sflag, size = 0x4, scoped, tag = 'scoped memory for tpu_custom_call.1']
    #allocation4 [shape = 's32[1]{0}', space=sflag, size = 0x4, scoped, tag = 'scoped memory for tpu_custom_call.1']
    #allocation5 [shape = 'u8[8192]{0}', space=vmem, size = 0x2000, scoped, tag = 'output window, operand 0, single buffered']
    %8 = vsyncpa [#allocation3], 0
    %9 = vsyncpa [#allocation4], 0
    // Predicated region
    $region2: #{tpu_custom_call.1} parent=1 // pred_check
      _
    $region3: #{tpu_custom_call.1} parent=1 // pred_check_branch
      %11 = sbr.rel (0) target = $region5
    $region4: #{tpu_custom_call.1} parent=1 // pred_region
      %s13 = ssub.s32 256, 256
      %14 = vsyncadd [#allocation3], %s13
      %s15 = sshll.u32 [#allocation2], 4
      %s16 = int_to_ptr.vmem [resolvable:$true] %s15
      %21 = dma.hbm_to_vmem [thread:$0]  %s0, 256, %s16, [#allocation3], 128, 128, 8
    $region5: #{tpu_custom_call.1} parent=1 // pred_fallthru
      _
    // Predicated region
    $region6: #{tpu_custom_call.1} parent=1 // pred_check
      _
    $region7: #{tpu_custom_call.1} parent=1 // pred_check_branch
      %23 = sbr.rel (0) target = $region9
    $region8: #{tpu_custom_call.1} parent=1 // pred_region
      _
    $region9: #{tpu_custom_call.1} parent=1 // pred_fallthru
      _
    // Predicated region
    $region10: #{tpu_custom_call.1} parent=1 // pred_check
      _
    $region11: #{tpu_custom_call.1} parent=1 // pred_check_branch
      %25 = sbr.rel (0) target = $region13
    $region12: #{tpu_custom_call.1} parent=1 // pred_region
      _
    $region13: #{tpu_custom_call.1} parent=1 // pred_fallthru
      _
    // Predicated region
    $region14: #{tpu_custom_call.1} parent=1 // pred_check
      _
    $region15: #{tpu_custom_call.1} parent=1 // pred_check_branch
      %27 = sbr.rel (0) target = $region17
    $region16: #{tpu_custom_call.1} parent=1 // pred_region
      %28 = dma.done [#allocation3], 256
    $region17: #{tpu_custom_call.1} parent=1 // pred_fallthru
      _
    %v29 = vld [vmem:[#allocation2] sm:$0xff]
    %v30 = vld [vmem:[#allocation2 + $0x8] sm:$0xff]
    %v33 = vcombine.high %v29, %v29
    %v34 = vcombine.high %v30, %v30
    %vm37 = vcmask 1043456
    %v38 = vsel %vm37, %v29, 0.0
    %v39 = vsel %vm37, %v30, 0.0
    %v40 = vadd.f32 %v38, %v39
    %v41 = vsel %vm37, %v33, 0.0
    %v42 = vsel %vm37, %v34, 0.0
    %v43 = vadd.f32 %v41, %v42
    %v44 = vsel %vm37, %v40, 0.0
    %v45 = vsel %vm37, %v43, 0.0
    %v46 = vadd.f32 %v44, %v45
    %47 = vadd.xlane.f32.xlu0 %v46
    %v48 = vpop.xlane.xlu0 %47
    %v49 = vmul.f32 %v48, 0.001953125
    %v52 = vunpack.c.l.s4 839922192
    %v53 = vunpack.c.0.s8 %v52
    %v54 = vlaneseq
    %v55 = vshrl.u32 %v54, 7
    %v56 = vsub.s32 %v53, %v55
    %v57 = vrot.slane %v49, %v56
    %v59 = vsub.f32 %v29, %v57
    %v60 = vsub.f32 %v30, %v57
    %v61 = vmul.f32 %v59, %v59
    %v62 = vmul.f32 %v60, %v60
    %v65 = vcombine.high %v61, %v61
    %v66 = vcombine.high %v62, %v62
    %v69 = vsel %vm37, %v61, 0.0
    %v70 = vsel %vm37, %v62, 0.0
    %v71 = vadd.f32 %v69, %v70
    %v72 = vsel %vm37, %v65, 0.0
    %v73 = vsel %vm37, %v66, 0.0
    %v74 = vadd.f32 %v72, %v73
    %v75 = vsel %vm37, %v71, 0.0
    %v76 = vsel %vm37, %v74, 0.0
    %v77 = vadd.f32 %v75, %v76
    %78 = vadd.xlane.f32.xlu0 %v77
    %v79 = vpop.xlane.xlu0 %78
    %v80 = vmul.f32 %v79, 0.001953125
    %v81 = vadd.f32 %v80, 1e-05
    %v82 = vrsqrt.pop %v81
    %v83 = vld [vmem:[%s1] sm:$0xf]
    %v84 = vmul.f32 %v83, %v82
    %v85 = vld [vmem:[%s2] sm:$0xf]
    %v86 = vmul.f32 %v49, %v84
    %v87 = vsub.f32 %v85, %v86
    %89 = vset.pattern.permute.xlu0 0
    %90 = vperm.xlu0 %89, %v84
    %v91 = vpop.permute.xlu0 %90
    %v93 = vunpack.c.l.s4 839922192
    %v94 = vunpack.c.0.s8 %v93
    %v95 = vlaneseq
    %v96 = vshrl.u32 %v95, 7
    %v97 = vsub.s32 %v94, %v96
    %v98 = vrot.slane %v91, %v97
    %v100 = vmul.f32 %v29, %v98
    %v101 = vmul.f32 %v30, %v98
    %103 = vset.pattern.permute.xlu0 0
    %104 = vperm.xlu0 %103, %v87
    %v105 = vpop.permute.xlu0 %104
    %v107 = vunpack.c.l.s4 839922192
    %v108 = vunpack.c.0.s8 %v107
    %v109 = vlaneseq
    %v110 = vshrl.u32 %v109, 7
    %v111 = vsub.s32 %v108, %v110
    %v112 = vrot.slane %v105, %v111
    %v114 = vadd.f32 %v100, %v112
    %v115 = vadd.f32 %v101, %v112
    %116 = vst [vmem:[#allocation5] sm:$0xff] %v114
    %117 = vst [vmem:[#allocation5 + $0x8] sm:$0xff] %v115
    // Predicated region
    $region18: #{tpu_custom_call.1} parent=1 // pred_check
      _
    $region19: #{tpu_custom_call.1} parent=1 // pred_check_branch
      %119 = sbr.rel (0) target = $region21
    $region20: #{tpu_custom_call.1} parent=1 // pred_region
      %s121 = ssub.s32 256, 256
      %122 = vsyncadd [#allocation4], %s121
      %s123 = sshll.u32 [#allocation5], 4
      %s124 = int_to_ptr.vmem [resolvable:$true] %s123
      %129 = dma.vmem_to_hbm [thread:$0]  %s124, 256, %s3, [#allocation4], 128, 128, 8
    $region21: #{tpu_custom_call.1} parent=1 // pred_fallthru
      _
    // Predicated region
    $region22: #{tpu_custom_call.1} parent=1 // pred_check
      _
    $region23: #{tpu_custom_call.1} parent=1 // pred_check_branch
      %131 = sbr.rel (0) target = $region25
    $region24: #{tpu_custom_call.1} parent=1 // pred_region
      %132 = dma.done [#allocation4], 256
    $region25: #{tpu_custom_call.1} parent=1 // pred_fallthru
      _
    %133 = vsyncpa [#allocation3], 1
    %134 = vsyncpa [#allocation4], 1

</llo_original>
